<compile_context>
chip_gen: v5e
topology: v5e:2x2
jax: 0.10.0
libtpu: 0.0.40
codegen_flags: <defaults>
</compile_context>

<pallas_src>
import jax
import jax.numpy as jnp
from jax.experimental import pallas as pl
from jax.experimental.pallas import tpu as pltpu


def _caption_seq_kernel(embeds_ref, lens_ref, w_ref, b_ref, out_ref):
    """Fused mean_with_lens + Linear on one batch tile.

    embeds_ref : [TN, T, D] float32/bfloat16  (VMEM, streamed)
    lens_ref   : [TN, 1]    int32             (VMEM, streamed)
    w_ref      : [D, S_pad] float32           (VMEM, resident)
    b_ref      : [1, S_pad] float32           (VMEM, resident)
    out_ref    : [TN, S_pad] embeds dtype     (VMEM)
    """
    e = embeds_ref[...]                                  # native dtype, no upcast
    lens = lens_ref[...]                                 # [TN, 1] int32
    tn, t, _ = e.shape

    # 2-D time mask: one iota/compare per (row, t); broadcast across the lane
    # (D) dim is a cheap vreg splat.
    t_idx = jax.lax.broadcasted_iota(jnp.int32, (tn, t), 1)
    mask = (t_idx < lens).astype(e.dtype)                # [TN, T]
    masked = e * mask[:, :, None]                        # [TN, T, D], native dtype

    # Length-masked sum over time; f32 accumulation folded into the reduce.
    summed = jnp.sum(masked, axis=1, dtype=jnp.float32)  # [TN, D] f32

    # Matmul first (lane-dense S_pad output), then per-row scale by 1/len.
    out = jnp.dot(summed, w_ref[...], preferred_element_type=jnp.float32)
    # NOTE: rows with lens == 0 produce output == bias (matches the reference
    # below; strict PyTorch mean_with_lens would divide by zero).
    denom = jnp.maximum(lens, 1).astype(jnp.float32)     # [TN, 1]
    out = out * (1.0 / denom) + b_ref[...]
    out_ref[...] = out.astype(out_ref.dtype)


def _round_up(x, m):
    return ((x + m - 1) // m) * m


def _vmem_capacity_bytes():
    try:
        info = pltpu.get_tpu_info()
        cap = getattr(info, "vmem_capacity_bytes", None)
        if cap:
            return int(cap)
    except Exception:
        pass
    return 64 * 1024 * 1024  # conservative (v7x per-TC)


def caption_seq_outputs(embeds, lens, w, b, *, tile_n=None):
    """seq_outputs = Linear(mean_with_lens(embeds, lens)) via a tiled Pallas kernel.

    embeds: [N, T, D]  (f32 or bf16)
    lens:   [N]        int
    w:      [D, S]     (nn.Linear weight, transposed)
    b:      [S]
    """
    N, T, D = embeds.shape
    S = w.shape[1]
    in_dtype = embeds.dtype
    dtype_bytes = jnp.dtype(in_dtype).itemsize
    out_dtype = in_dtype
    out_bytes = jnp.dtype(out_dtype).itemsize

    # TODO(synk): if production D (d_model) is not a multiple of 128, fix the
    # layout upstream (or fuse (T,D) lane-dense); lanes are underfilled otherwise.

    # --- lane-dense output: pad S to a multiple of 128 (sliced back after).
    #     W/b are pre-cast to f32 once here so the kernel never casts resident
    #     operands per grid step.
    S_pad = _round_up(max(S, 1), 128)
    w_f32 = jnp.asarray(w, dtype=jnp.float32)
    b2d = jnp.asarray(b, dtype=jnp.float32).reshape(1, S)
    if S_pad != S:
        w_f32 = jnp.pad(w_f32, ((0, 0), (0, S_pad - S)))
        b2d = jnp.pad(b2d, ((0, 0), (0, S_pad - S)))

    lens2d = lens.astype(jnp.int32).reshape(N, 1)

    vmem_cap = _vmem_capacity_bytes()

    # --- batch tile: ~8 MiB blocks on 64 MiB VMEM (v7x), ~16 MiB on 128 MiB
    #     (v5e/v6e).  No batch padding: ragged last tile handled by Pallas.
    if tile_n is None:
        target_block_bytes = min(16 * 1024 * 1024, vmem_cap // 8)
        row_bytes = max(1, T * D * dtype_bytes)
        tn = max(1, target_block_bytes // row_bytes)
        if tn >= N:
            if N >= 16:
                # Whole batch would fit in one block: split into >=2 tiles so
                # both TensorCores get work under "parallel" semantics.
                tn = _round_up(pl.cdiv(N, 2), 8)
            else:
                tn = N
        else:
            tn = max(8, (tn // 8) * 8)  # sublane-friendly tiles
    else:
        tn = min(tile_n, N)

    grid = (pl.cdiv(N, tn),)

    # VMEM budget: double-buffered streamed blocks + resident W/b + output,
    # plus headroom for in-kernel temporaries (masked product, reduce temp).
    block_bytes = tn * T * D * dtype_bytes
    vmem_need = (2 * block_bytes                       # embeds double-buffer
                 + 2 * tn * 4                          # lens
                 + 2 * (D * S_pad * 4 + S_pad * 4)     # W + b (f32)
                 + 2 * tn * S_pad * out_bytes          # output
                 + 3 * block_bytes)                    # in-kernel temporaries
    vmem_limit = int(min(int(vmem_cap * 0.9),
                         max(vmem_need, 16 * 1024 * 1024)))

    cost = pl.CostEstimate(
        flops=2 * N * D * S_pad + 2 * N * T * D,
        transcendentals=0,
        bytes_accessed=(N * T * D * dtype_bytes
                        + N * 4
                        + D * S_pad * 4
                        + S_pad * 4
                        + N * S_pad * out_bytes),
    )

    out = pl.pallas_call(
        _caption_seq_kernel,
        out_shape=jax.ShapeDtypeStruct((N, S_pad), out_dtype),
        grid=grid,
        in_specs=[
            pl.BlockSpec((tn, T, D), lambda i: (i, 0, 0)),   # streamed
            pl.BlockSpec((tn, 1), lambda i: (i, 0)),          # streamed
            pl.BlockSpec((D, S_pad), lambda i: (0, 0)),       # resident
            pl.BlockSpec((1, S_pad), lambda i: (0, 0)),       # resident
        ],
        out_specs=pl.BlockSpec((tn, S_pad), lambda i: (i, 0)),
        compiler_params=pltpu.CompilerParams(
            dimension_semantics=("parallel",),                # megacore sharding
            vmem_limit_bytes=vmem_limit,
        ),
        cost_estimate=cost,
    )(embeds, lens2d, w_f32, b2d)

    return out[:, :S]


def caption_sequence_model_forward(input_dict, params, end_idx):
    """Mirrors CaptionSequenceModel.forward for the wrapper's compute.

    input_dict must already contain the inner model's output:
      output['embeds']: [N, T, D]    (inner captioning model's hidden states)
      output['seqs']:   [N, T] int32 (inference mode only)
    """
    # TODO(synk): the inner captioning model (`self.model`) is an arbitrary
    # encoder/decoder and is not reproduced here; its 'embeds'/'seqs' outputs
    # are taken as kernel inputs.
    output = dict(input_dict["model_output"])
    mode = input_dict["mode"]
    if mode == "train":
        lens = input_dict["cap_lens"] - 1
    elif mode == "inference":
        if input_dict.get("sample_method", None) == "beam":
            return output
        seqs = output["seqs"]
        lens = jnp.where(seqs == end_idx,
                         jnp.zeros_like(seqs),
                         jnp.ones_like(seqs)).sum(axis=1)
    else:
        raise Exception("mode should be either 'train' or 'inference'")

    seq_outputs = caption_seq_outputs(
        output["embeds"], lens, params["w"], params["b"])
    output["seq_outputs"] = seq_outputs
    return output


def _ref_seq_outputs(embeds, lens, w, b):
    T = embeds.shape[1]
    e = embeds.astype(jnp.float32)
    mask = (jnp.arange(T)[None, :, None] < lens[:, None, None]).astype(jnp.float32)
    mean = (e * mask).sum(1) / jnp.maximum(lens, 1)[:, None].astype(jnp.float32)
    return mean @ w.astype(jnp.float32) + b[None, :].astype(jnp.float32)


if __name__ == "__main__":
    # Small shapes: batch=2, seq=8, d_model=32, seq_output_size=16.
    N, T, D, S = 2, 8, 32, 16
    END_IDX = 9

    key = jax.random.PRNGKey(0)
    k_emb, k_w, k_b, k_seq, k_emb2, k_len2 = jax.random.split(key, 6)

    embeds = jax.random.normal(k_emb, (N, T, D), dtype=jnp.float32)
    # nn.Linear(D, S): weight [S, D], bias [S]; store transposed for mean @ W.
    w = (jax.random.normal(k_w, (S, D), dtype=jnp.float32) * 0.02).T  # [D, S]
    b = jax.random.normal(k_b, (S,), dtype=jnp.float32)               # [S]
    params = {"w": w, "b": b}

    # --- train mode ---
    cap_lens = jnp.array([6, 4], dtype=jnp.int32)  # caption lengths incl. <eos>
    train_in = {
        "mode": "train",
        "cap_lens": cap_lens,
        "model_output": {"embeds": embeds},
    }
    train_out = caption_sequence_model_forward(train_in, params, END_IDX)
    jax.block_until_ready(train_out["seq_outputs"])

    expected = _ref_seq_outputs(embeds, cap_lens - 1, w, b)
    assert jnp.allclose(train_out["seq_outputs"], expected, atol=1e-5, rtol=1e-5)

    # --- inference mode ---
    seqs = jax.random.randint(k_seq, (N, T), 0, 8, dtype=jnp.int32)
    seqs = seqs.at[0, 5:].set(END_IDX)  # row 0 terminates early
    infer_in = {
        "mode": "inference",
        "model_output": {"embeds": embeds, "seqs": seqs},
    }
    infer_out = caption_sequence_model_forward(infer_in, params, END_IDX)
    jax.block_until_ready(infer_out["seq_outputs"])

    expected_inf = _ref_seq_outputs(
        embeds, jnp.where(seqs == END_IDX, 0, 1).sum(1), w, b)
    assert jnp.allclose(infer_out["seq_outputs"], expected_inf,
                        atol=1e-5, rtol=1e-5)

    # --- ragged-tile path (N not a multiple of tile_n, no batch padding) ---
    N2 = 20
    embeds2 = jax.random.normal(k_emb2, (N2, T, D), dtype=jnp.float32)
    lens2 = jax.random.randint(k_len2, (N2,), 1, T + 1, dtype=jnp.int32)
    got2 = caption_seq_outputs(embeds2, lens2, w, b, tile_n=8)
    jax.block_until_ready(got2)
    expected2 = _ref_seq_outputs(embeds2, lens2, w, b)
    assert jnp.allclose(got2, expected2, atol=1e-5, rtol=1e-5)

    print("KERNEL_OK")
</pallas_src>

<mosaic_0001>
module attributes {stable_mosaic.version = 11 : i64} {
  func.func @_caption_seq_kernel(%arg0: i32, %arg1: memref<2x8x32xf32, #tpu.memory_space<vmem>>, %arg2: memref<2x1xi32, #tpu.memory_space<vmem>>, %arg3: memref<32x128xf32, #tpu.memory_space<vmem>>, %arg4: memref<1x128xf32, #tpu.memory_space<vmem>>, %arg5: memref<2x128xf32, #tpu.memory_space<vmem>>) attributes {dimension_semantics = [#tpu.dimension_semantics<parallel>], iteration_bounds = array<i64: 1>, scalar_prefetch = 0 : i64, scratch_operands = 0 : i64, tpu.core_type = #tpu.core_type<tc>, window_params = [{transform_indices = @transform_0, window_bounds = array<i64: 2, 8, 32>}, {transform_indices = @transform_1, window_bounds = array<i64: 2, 1>}, {pipeline_mode = #tpu.pipeline_mode<synchronous>, transform_indices = @transform_2, window_bounds = array<i64: 32, 128>}, {pipeline_mode = #tpu.pipeline_mode<synchronous>, transform_indices = @transform_3, window_bounds = array<i64: 1, 128>}, {transform_indices = @transform_4, window_bounds = array<i64: 2, 128>}]} {
    %c0 = arith.constant 0 : index
    %c0_0 = arith.constant 0 : index
    %c0_1 = arith.constant 0 : index
    %0 = vector.load %arg1[%c0, %c0_0, %c0_1] : memref<2x8x32xf32, #tpu.memory_space<vmem>>, vector<2x8x32xf32>
    %c0_2 = arith.constant 0 : index
    %c0_3 = arith.constant 0 : index
    %1 = vector.load %arg2[%c0_2, %c0_3] : memref<2x1xi32, #tpu.memory_space<vmem>>, vector<2x1xi32>
    %2 = tpu.iota {dimensions = array<i32: 1>} : vector<2x8xi32>
    %3 = vector.broadcast %1 : vector<2x1xi32> to vector<2x8xi32>
    %4 = arith.cmpi slt, %2, %3 : vector<2x8xi32>
    %5 = arith.extui %4 : vector<2x8xi1> to vector<2x8xi32>
    %6 = arith.sitofp %5 : vector<2x8xi32> to vector<2x8xf32>
    %7 = vector.shape_cast %6 : vector<2x8xf32> to vector<2x8x1xf32>
    %8 = vector.broadcast %7 : vector<2x8x1xf32> to vector<2x8x32xf32>
    %9 = arith.mulf %0, %8 : vector<2x8x32xf32>
    %cst = arith.constant dense<0.000000e+00> : vector<2x32xf32>
    %10 = vector.multi_reduction <add>, %9, %cst [1] : vector<2x8x32xf32> to vector<2x32xf32>
    %c0_4 = arith.constant 0 : index
    %c0_5 = arith.constant 0 : index
    %11 = vector.load %arg3[%c0_4, %c0_5] : memref<32x128xf32, #tpu.memory_space<vmem>>, vector<32x128xf32>
    %cst_6 = arith.constant dense<0.000000e+00> : vector<2x128xf32>
    %12 = tpu.matmul %10, %11, %cst_6 {dimension_numbers = #tpu.dot_dimension_numbers<[1], [0], [0], [1], [0, 0, 1, 1], [], []>} : vector<2x32xf32>, vector<32x128xf32>, vector<2x128xf32> -> vector<2x128xf32>
    %c1_i32 = arith.constant 1 : i32
    %13 = vector.broadcast %c1_i32 : i32 to vector<2x1xi32>
    %14 = arith.maxsi %1, %13 : vector<2x1xi32>
    %15 = arith.sitofp %14 : vector<2x1xi32> to vector<2x1xf32>
    %cst_7 = arith.constant 1.000000e+00 : f32
    %16 = vector.broadcast %cst_7 : f32 to vector<2x1xf32>
    %17 = arith.divf %16, %15 : vector<2x1xf32>
    %18 = vector.broadcast %17 : vector<2x1xf32> to vector<2x128xf32>
    %19 = arith.mulf %12, %18 : vector<2x128xf32>
    %c0_8 = arith.constant 0 : index
    %c0_9 = arith.constant 0 : index
    %20 = vector.load %arg4[%c0_8, %c0_9] : memref<1x128xf32, #tpu.memory_space<vmem>>, vector<1x128xf32>
    %21 = vector.broadcast %20 : vector<1x128xf32> to vector<2x128xf32>
    %22 = arith.addf %19, %21 : vector<2x128xf32>
    %c0_10 = arith.constant 0 : index
    %c0_11 = arith.constant 0 : index
    %23 = vector.load %arg5[%c0_10, %c0_11] : memref<2x128xf32, #tpu.memory_space<vmem>>, vector<2x128xf32>
    tpu.vector_store %arg5[%c0_10, %c0_11], %22 {strides = array<i32>} : memref<2x128xf32, #tpu.memory_space<vmem>>, vector<2x128xf32>,
    return
  }
  func.func @transform_0(%arg0: i32) -> (i32, i32, i32) {
    %c0_i32 = arith.constant 0 : i32
    %c0_i32_0 = arith.constant 0 : i32
    %c0_i32_1 = arith.constant 0 : i32
    return %arg0, %c0_i32, %c0_i32_0 : i32, i32, i32
  }
  func.func @transform_1(%arg0: i32) -> (i32, i32) {
    %c0_i32 = arith.constant 0 : i32
    %c0_i32_0 = arith.constant 0 : i32
    return %arg0, %c0_i32 : i32, i32
  }
  func.func @transform_2(%arg0: i32) -> (i32, i32) {
    %c0_i32 = arith.constant 0 : i32
    %c0_i32_0 = arith.constant 0 : i32
    %c0_i32_1 = arith.constant 0 : i32
    return %c0_i32, %c0_i32_0 : i32, i32
  }
  func.func @transform_3(%arg0: i32) -> (i32, i32) {
    %c0_i32 = arith.constant 0 : i32
    %c0_i32_0 = arith.constant 0 : i32
    %c0_i32_1 = arith.constant 0 : i32
    return %c0_i32, %c0_i32_0 : i32, i32
  }
  func.func @transform_4(%arg0: i32) -> (i32, i32) {
    %c0_i32 = arith.constant 0 : i32
    %c0_i32_0 = arith.constant 0 : i32
    return %arg0, %c0_i32 : i32, i32
  }
}

</mosaic_0001>

<llo_original>
// kernel: tpu_custom_call.1
$region0: #{tpu_custom_call.1}
  #allocation0 [shape = 'u32[]', space=smem, size = 0x4, offset = 0x4, fixed_abs, tag = 'smem constant byte address 0x4 - core index']
  #allocation1 [shape = 'u32[72,128]{1,0:T(1,128)}', space=vmem, size = 0x9000, scoped, tag = 'internal scratch']
  %s0 = inlined_call_operand.hbm [shape: f32[2,8,32], index: 0, kind: input, shape index: {}]
  %s1 = inlined_call_operand.vmem [shape: s32[2,1], index: 1, kind: input, shape index: {}]
  %s2 = inlined_call_operand.hbm [shape: f32[32,128], index: 2, kind: input, shape index: {}]
  %s3 = inlined_call_operand.vmem [shape: f32[1,128], index: 3, kind: input, shape index: {}]
  %s4 = inlined_call_operand.hbm [shape: f32[2,128], index: 4, kind: output, shape index: {}]
  %s5 = sld [smem:[#allocation0]]
  $region34: #{tpu_custom_call.1} parent=0
    _
  %s7 = ssub.s32 1, %s5
  %s8 = scalar_select 0, %s7, %s5
  $region1: #{tpu_custom_call.1} parent=0
    #allocation2 [shape = 'u8[8192]{0}', space=vmem, size = 0x2000, scoped, tag = 'input window, operand 0, single buffered']
    #allocation3 [shape = 's32[1]{0}', space=sflag, size = 0x4, scoped, tag = 'scoped memory for tpu_custom_call.1']
    #allocation4 [shape = 's32[1]{0}', space=sflag, size = 0x4, scoped, tag = 'scoped memory for tpu_custom_call.1']
    #allocation5 [shape = 'u8[16384]{0}', space=vmem, size = 0x4000, scoped, tag = 'input window, operand 2, single buffered']
    #allocation6 [shape = 's32[1]{0}', space=sflag, size = 0x4, scoped, tag = 'scoped memory for tpu_custom_call.1']
    #allocation7 [shape = 'u8[1024]{0}', space=vmem, size = 0x400, scoped, tag = 'output window, operand 0, single buffered']
    %9 = vsyncpa [#allocation3], 0
    %10 = vsyncpa [#allocation6], 0
    %11 = vsyncpa [#allocation4], 0
    // Predicated region
    $region2: #{tpu_custom_call.1} parent=1 // pred_check
      _
    $region3: #{tpu_custom_call.1} parent=1 // pred_check_branch
      %13 = sbr.rel (0) target = $region5
    $region4: #{tpu_custom_call.1} parent=1 // pred_region
      %15 = vsyncadd [#allocation3], 0
      %s16 = sshll.u32 %s0, 4
      %s17 = int_to_ptr.hbm [resolvable:$true] %s16
      %s18 = sshll.u32 [#allocation2], 4
      %s19 = int_to_ptr.vmem [resolvable:$true] %s18
      %24 = dma.hbm_to_vmem [thread:$0]  %s17, 256, %s19, [#allocation3], 128, 128, 8
    $region5: #{tpu_custom_call.1} parent=1 // pred_fallthru
      _
    // Predicated region
    $region6: #{tpu_custom_call.1} parent=1 // pred_check
      _
    $region7: #{tpu_custom_call.1} parent=1 // pred_check_branch
      %26 = sbr.rel (0) target = $region9
    $region8: #{tpu_custom_call.1} parent=1 // pred_region
      _
    $region9: #{tpu_custom_call.1} parent=1 // pred_fallthru
      _
    // Predicated region
    $region10: #{tpu_custom_call.1} parent=1 // pred_check
      _
    $region11: #{tpu_custom_call.1} parent=1 // pred_check_branch
      %28 = sbr.rel (0) target = $region13
    $region12: #{tpu_custom_call.1} parent=1 // pred_region
      %30 = vsyncadd [#allocation6], 0
      %s31 = sshll.u32 %s2, 4
      %s32 = int_to_ptr.hbm [resolvable:$true] %s31
      %s33 = sshll.u32 [#allocation5], 4
      %s34 = int_to_ptr.vmem [resolvable:$true] %s33
      %39 = dma.hbm_to_vmem [thread:$0]  %s32, 512, %s34, [#allocation6], 128, 128, 8
    $region13: #{tpu_custom_call.1} parent=1 // pred_fallthru
      _
    // Predicated region
    $region14: #{tpu_custom_call.1} parent=1 // pred_check
      _
    $region15: #{tpu_custom_call.1} parent=1 // pred_check_branch
      %41 = sbr.rel (0) target = $region17
    $region16: #{tpu_custom_call.1} parent=1 // pred_region
      _
    $region17: #{tpu_custom_call.1} parent=1 // pred_fallthru
      _
    // Predicated region
    $region18: #{tpu_custom_call.1} parent=1 // pred_check
      _
    $region19: #{tpu_custom_call.1} parent=1 // pred_check_branch
      %43 = sbr.rel (0) target = $region21
    $region20: #{tpu_custom_call.1} parent=1 // pred_region
      %45 = dma.done [#allocation3], 256
    $region21: #{tpu_custom_call.1} parent=1 // pred_fallthru
      _
    // Predicated region
    $region22: #{tpu_custom_call.1} parent=1 // pred_check
      _
    $region23: #{tpu_custom_call.1} parent=1 // pred_check_branch
      %47 = sbr.rel (0) target = $region25
    $region24: #{tpu_custom_call.1} parent=1 // pred_region
      %49 = dma.done [#allocation6], 512
    $region25: #{tpu_custom_call.1} parent=1 // pred_fallthru
      _
    %v50 = vld [vmem:[#allocation2] sm:$0xff]
    %v51 = vld [vmem:[#allocation2 + $0x8] sm:$0xff]
    %v52 = vld [vmem:[%s1] sm:$0x3]
    %v53 = vlaneseq
    %v54 = vand.u32 %v53, 127
    %55 = vset.pattern.permute.xlu0 0
    %56 = vperm.xlu0 %55, %v52
    %v57 = vpop.permute.xlu0 %56
    %vm58 = vcmp.lt.s32.totalorder %v54, %v57
    %v59 = vsel %vm58, 1, 0
    %v60 = vcvt.s32.f32 %v59
    %v61 = vperm.slane %v60, 0
    %v62 = vlaneseq
    %v63 = vshrl.u32 %v62, 7
    %65 = vset.pattern.permute.xlu0 %v63
    %66 = vperm.xlu0 %65, %v61
    %v67 = vpop.permute.xlu0 %66
    %v68 = vperm.slane %v60, 1
    %v69 = vlaneseq
    %v70 = vshrl.u32 %v69, 7
    %72 = vset.pattern.permute.xlu0 %v70
    %73 = vperm.xlu0 %72, %v68
    %v74 = vpop.permute.xlu0 %73
    %v75 = vmul.f32 %v50, %v67
    %v76 = vmul.f32 %v51, %v74
    %vm77 = vcmask 261120
    %v78 = vsel %vm77, %v75, 0.0
    %v79 = vrot.slane %v78, 4
    %v80 = vadd.f32 %v78, %v79
    %v81 = vrot.slane %v80, 2
    %v82 = vadd.f32 %v80, %v81
    %v83 = vrot.slane %v82, 1
    %v84 = vadd.f32 %v82, %v83
    %v85 = vsel %vm77, %v76, 0.0
    %v86 = vrot.slane %v85, 4
    %v87 = vadd.f32 %v85, %v86
    %v88 = vrot.slane %v87, 2
    %v89 = vadd.f32 %v87, %v88
    %v90 = vrot.slane %v89, 1
    %v91 = vadd.f32 %v89, %v90
    %v92 = vld [vmem:[#allocation5] sm:$0xff]
    %v93 = vld [vmem:[#allocation5 + $0x8] sm:$0xff]
    %v94 = vld [vmem:[#allocation5 + $0x10] sm:$0xff]
    %v95 = vld [vmem:[#allocation5 + $0x18] sm:$0xff]
    %vm98 = vcmask 1041409
    %v99 = vsel %vm98, %v91, %v84
    %v100 = vsel %vm77, %v99, 0
    %102 = vmatpush.msra.mxu0 0.0
    %103 = vmatpush.msra.mxu0 0.0
    %104 = vmatpush.msra.mxu0 0.0
    %105 = vmatpush.msra.mxu0 0.0
    %106 = vmatpush.msra.mxu0 0.0
    %107 = vmatpush.msra.mxu0 0.0
    %108 = vmatpush.msra.mxu0 0.0
    %109 = vmatpush.msra.mxu0 0.0
    %110 = vmatpush.msra.mxu0 0.0
    %111 = vmatpush.msra.mxu0 0.0
    %112 = vmatpush.msra.mxu0 0.0
    %113 = vmatpush.msra.mxu0 0.0
    %114 = vmatpush.msra.mxu0 %v95
    %115 = vmatpush.msra.mxu0 %v94
    %116 = vmatpush.msra.mxu0 %v93
    %117 = vmatpush.msra.mxu0 %v92
    %118 = vmatmul.f32.gmra.mxu0 %v100
    %v119 = vpop.f32.mrf.mxu0
    %v120 = vadd.f32 0.0, %v119
    %121 = vdwg.mxu0
    %vm122 = vcmp.gt.s32.totalorder %v52, 1
    %v123 = vsel %vm122, %v52, 1
    %v124 = vcvt.s32.f32 %v123
    %v125 = vrcp.pop %v124
    %v126 = vmul.f32 %v124, %v125
    %v127 = vsub.f32 1.0, %v126
    %v128 = vmul.f32 %v125, %v127
    %v129 = vadd.f32 %v125, %v128
    %vm130 = vweird.f32 %v124
    %vm131 = vweird.f32 %v125
    %vm132 = vmor %vm130, %vm131
    %v133 = vsel %vm132, %v125, %v129
    %v134 = vand.u32 2147483647, %v124
    %vm135 = vcmp.eq.f32.partialorder %v134, 8.507059e+37
    %v136 = vand.u32 %v124, 2147483648
    %v137 = vor.u32 1.1754944e-38, %v136
    %v138 = vsel %vm135, %v137, %v133
    %v139 = vmul.f32 1.0, %v138
    %141 = vset.pattern.permute.xlu0 0
    %142 = vperm.xlu0 %141, %v139
    %v143 = vpop.permute.xlu0 %142
    %v145 = vmul.f32 %v120, %v143
    %v146 = vld [vmem:[%s3] sm:$0x1]
    %v148 = vperm.slane %v146, 0
    %v150 = vadd.f32 %v145, %v148
    %151 = vst [vmem:[#allocation7] sm:$0x3] %v150
    // Predicated region
    $region26: #{tpu_custom_call.1} parent=1 // pred_check
      _
    $region27: #{tpu_custom_call.1} parent=1 // pred_check_branch
      %153 = sbr.rel (0) target = $region29
    $region28: #{tpu_custom_call.1} parent=1 // pred_region
      %155 = vsyncadd [#allocation4], 0
      %s157 = sshll.u32 [#allocation7], 4
      %s158 = int_to_ptr.vmem [resolvable:$true] %s157
      %s159 = sshll.u32 %s4, 4
      %s160 = int_to_ptr.hbm [resolvable:$true] %s159
      %162 = dma.vmem_to_hbm [thread:$0]  %s158, 32, %s160, [#allocation4]
    $region29: #{tpu_custom_call.1} parent=1 // pred_fallthru
      _
    // Predicated region
    $region30: #{tpu_custom_call.1} parent=1 // pred_check
      _
    $region31: #{tpu_custom_call.1} parent=1 // pred_check_branch
      %164 = sbr.rel (0) target = $region33
    $region32: #{tpu_custom_call.1} parent=1 // pred_region
      %166 = dma.done [#allocation4], 32
    $region33: #{tpu_custom_call.1} parent=1 // pred_fallthru
      _
    %167 = vsyncpa [#allocation3], 1
    %168 = vsyncpa [#allocation6], 1
    %169 = vsyncpa [#allocation4], 1

</llo_original>
